<compile_context>
chip_gen: v7x
topology: tpu7x:2x2x1
jax: 0.10.0
libtpu: 0.0.40
codegen_flags: <defaults>
</compile_context>

<pallas_src>
import jax
import jax.numpy as jnp
from jax.experimental import pallas as pl
from jax.experimental.pallas import tpu as pltpu


def _mlp_kernel(p_ref, x_ref, o_ref):
    # p_ref: SMEM f32[16] =
    #        [0.5*w1 row-major (9) | 0.5*b1 (3) | 0.5*w2 (3) | b2 + 0.5*sum(w2) (1)]
    # x_ref: VMEM f32/bf16 [3, TBS, 128]   (feature, batch-rows, batch-lanes)
    # o_ref: VMEM f32      [TBS, 128]
    x0 = x_ref[0].astype(jnp.float32)    # (TBS, 128) dense slab
    x1 = x_ref[1].astype(jnp.float32)
    x2 = x_ref[2].astype(jnp.float32)

    # fc1 + sigmoid (folded into a single tanh per hidden unit), on the VPU/EUP.
    t0 = jnp.tanh(p_ref[0] * x0 + p_ref[1] * x1 + p_ref[2] * x2 + p_ref[9])
    t1 = jnp.tanh(p_ref[3] * x0 + p_ref[4] * x1 + p_ref[5] * x2 + p_ref[10])
    t2 = jnp.tanh(p_ref[6] * x0 + p_ref[7] * x1 + p_ref[8] * x2 + p_ref[11])

    # fc2 (3 -> 1); the 0.5*sigmoid offset is pre-folded into p_ref[15].
    o_ref[...] = p_ref[12] * t0 + p_ref[13] * t1 + p_ref[14] * t2 + p_ref[15]


def neural_network_forward(x, w1, b1, w2, b2, *, rows_per_step=1024,
                           transit_bf16=False):
    """Forward pass matching the PyTorch module.

    x : [B, 3] float32
    w1: [3, 3] float32 (PyTorch layout: [out_features, in_features])
    b1: [3]    float32
    w2: [1, 3] float32
    b2: [1]    float32
    returns [B, 1] float32

    rows_per_step: batch-rows (of 128 lanes each) per grid step.
    transit_bf16 : optionally move activations HBM->VMEM in bf16 (params and
                   all arithmetic stay f32); halves input HBM traffic at the
                   cost of bf16-rounding the inputs.
    """
    x = jnp.asarray(x, jnp.float32)
    B = x.shape[0]
    lane, sub = 128, 8

    # ---- pack the 16 (pre-scaled) parameters into one SMEM buffer ---------
    w1f = jnp.asarray(w1, jnp.float32).reshape(3, 3)
    b1f = jnp.asarray(b1, jnp.float32).reshape(3)
    w2f = jnp.asarray(w2, jnp.float32).reshape(3)
    b2f = jnp.asarray(b2, jnp.float32).reshape(())
    params = jnp.concatenate([
        (0.5 * w1f).reshape(-1),                    # [0..8]   0.5 * w1[j, k]
        (0.5 * b1f),                                # [9..11]  0.5 * b1[j]
        (0.5 * w2f),                                # [12..14] 0.5 * w2[j]
        (b2f + 0.5 * jnp.sum(w2f)).reshape(1),      # [15]     folded bias
    ])                                              # f32[16]

    # ---- tile / grid selection --------------------------------------------
    rows_total = -(-B // lane)                      # 128-lane rows of batch
    rows_pad_min = -(-rows_total // sub) * sub      # multiple of 8 sublanes

    tbs = max(sub, (int(rows_per_step) // sub) * sub)
    tbs = min(tbs, 2048)                            # v5e scoped-VMEM safety cap
    tbs = min(tbs, rows_pad_min)
    # Guarantee >= 2 grid steps for moderate/large B so v7x's two TensorCores
    # both get batch tiles ("parallel" axis).
    if rows_pad_min >= 2 * sub and tbs > rows_pad_min // 2:
        tbs = -(-(rows_pad_min // 2) // sub) * sub

    grid_n = -(-rows_pad_min // tbs)
    rows_pad = grid_n * tbs
    b_pad = rows_pad * lane

    # ---- glue: relayout [B, 3] -> [3, rows_pad, 128] -----------------------
    # (One extra XLA pass over x; a feature-major producer upstream would
    #  remove it, but that is outside this module's [B, 3] interface.)
    x_pad = jnp.pad(x, ((0, b_pad - B), (0, 0)))            # [b_pad, 3]
    xt = jnp.transpose(x_pad).reshape(3, rows_pad, lane)    # [3, rows_pad, 128]
    if transit_bf16:
        xt = xt.astype(jnp.bfloat16)

    out = pl.pallas_call(
        _mlp_kernel,
        out_shape=jax.ShapeDtypeStruct((rows_pad, lane), jnp.float32),
        grid=(grid_n,),
        in_specs=[
            pl.BlockSpec(memory_space=pltpu.MemorySpace.SMEM),   # params
            pl.BlockSpec((3, tbs, lane), lambda i: (0, i, 0)),   # x tile
        ],
        out_specs=pl.BlockSpec((tbs, lane), lambda i: (i, 0)),
        compiler_params=pltpu.CompilerParams(
            dimension_semantics=("parallel",),
        ),
    )(params, xt)

    # Drop batch padding, restore PyTorch's [B, 1] output shape.
    return out.reshape(b_pad)[:B].reshape(B, 1)


def _reference(x, w1, b1, w2, b2):
    h = jax.nn.sigmoid(x @ w1.T + b1)
    return h @ w2.T + b2


if __name__ == "__main__":
    key = jax.random.PRNGKey(0)
    k_x, k_w1, k_b1, k_w2, k_b2 = jax.random.split(key, 5)

    # B not a multiple of 128 -> exercises padding; 16 batch-rows with
    # rows_per_step=8 -> a 2-step "parallel" grid (multi-tile path).
    B = 2000
    x = jax.random.normal(k_x, (B, 3), dtype=jnp.float32)

    # Deterministic parameter init (PyTorch nn.Linear shapes).
    w1 = jax.random.uniform(k_w1, (3, 3), jnp.float32, minval=-0.5, maxval=0.5)
    b1 = jax.random.uniform(k_b1, (3,), jnp.float32, minval=-0.5, maxval=0.5)
    w2 = jax.random.uniform(k_w2, (1, 3), jnp.float32, minval=-0.5, maxval=0.5)
    b2 = jax.random.uniform(k_b2, (1,), jnp.float32, minval=-0.5, maxval=0.5)

    y = neural_network_forward(x, w1, b1, w2, b2, rows_per_step=8)
    jax.block_until_ready(y)

    y_ref = _reference(x, w1, b1, w2, b2)
    assert y.shape == (B, 1), y.shape
    assert jnp.allclose(y, y_ref, atol=1e-5, rtol=1e-5), (
        float(jnp.max(jnp.abs(y - y_ref))))

    print("KERNEL_OK")
</pallas_src>

<mosaic_0001>
module attributes {stable_mosaic.version = 11 : i64} {
  func.func @_mlp_kernel(%arg0: i32, %arg1: memref<16xf32, #tpu.memory_space<smem>>, %arg2: memref<3x8x128xf32, #tpu.memory_space<vmem>>, %arg3: memref<8x128xf32, #tpu.memory_space<vmem>>) attributes {dimension_semantics = [#tpu.dimension_semantics<parallel>], iteration_bounds = array<i64: 2>, scalar_prefetch = 0 : i64, scratch_operands = 0 : i64, tpu.core_type = #tpu.core_type<tc>, window_params = [{transform_indices = @transform_0, window_bounds = array<i64: 16>}, {transform_indices = @transform_1, window_bounds = array<i64: 3, 8, 128>}, {transform_indices = @transform_2, window_bounds = array<i64: 8, 128>}]} {
    %c0 = arith.constant 0 : index
    %c0_0 = arith.constant 0 : index
    %c0_1 = arith.constant 0 : index
    %0 = vector.load %arg2[%c0, %c0_0, %c0_1] : memref<3x8x128xf32, #tpu.memory_space<vmem>>, vector<1x8x128xf32>
    %1 = vector.shape_cast %0 : vector<1x8x128xf32> to vector<8x128xf32>
    %c1 = arith.constant 1 : index
    %c0_2 = arith.constant 0 : index
    %c0_3 = arith.constant 0 : index
    %2 = vector.load %arg2[%c1, %c0_2, %c0_3] : memref<3x8x128xf32, #tpu.memory_space<vmem>>, vector<1x8x128xf32>
    %3 = vector.shape_cast %2 : vector<1x8x128xf32> to vector<8x128xf32>
    %c2 = arith.constant 2 : index
    %c0_4 = arith.constant 0 : index
    %c0_5 = arith.constant 0 : index
    %4 = vector.load %arg2[%c2, %c0_4, %c0_5] : memref<3x8x128xf32, #tpu.memory_space<vmem>>, vector<1x8x128xf32>
    %5 = vector.shape_cast %4 : vector<1x8x128xf32> to vector<8x128xf32>
    %c0_6 = arith.constant 0 : index
    %6 = memref.load %arg1[%c0_6] : memref<16xf32, #tpu.memory_space<smem>>
    %7 = vector.broadcast %6 : f32 to vector<8x128xf32>
    %8 = arith.mulf %7, %1 : vector<8x128xf32>
    %c1_7 = arith.constant 1 : index
    %9 = memref.load %arg1[%c1_7] : memref<16xf32, #tpu.memory_space<smem>>
    %10 = vector.broadcast %9 : f32 to vector<8x128xf32>
    %11 = arith.mulf %10, %3 : vector<8x128xf32>
    %12 = arith.addf %8, %11 : vector<8x128xf32>
    %c2_8 = arith.constant 2 : index
    %13 = memref.load %arg1[%c2_8] : memref<16xf32, #tpu.memory_space<smem>>
    %14 = vector.broadcast %13 : f32 to vector<8x128xf32>
    %15 = arith.mulf %14, %5 : vector<8x128xf32>
    %16 = arith.addf %12, %15 : vector<8x128xf32>
    %c9 = arith.constant 9 : index
    %17 = memref.load %arg1[%c9] : memref<16xf32, #tpu.memory_space<smem>>
    %18 = vector.broadcast %17 : f32 to vector<8x128xf32>
    %19 = arith.addf %16, %18 : vector<8x128xf32>
    %20 = math.tanh %19 : vector<8x128xf32>
    %c3 = arith.constant 3 : index
    %21 = memref.load %arg1[%c3] : memref<16xf32, #tpu.memory_space<smem>>
    %22 = vector.broadcast %21 : f32 to vector<8x128xf32>
    %23 = arith.mulf %22, %1 : vector<8x128xf32>
    %c4 = arith.constant 4 : index
    %24 = memref.load %arg1[%c4] : memref<16xf32, #tpu.memory_space<smem>>
    %25 = vector.broadcast %24 : f32 to vector<8x128xf32>
    %26 = arith.mulf %25, %3 : vector<8x128xf32>
    %27 = arith.addf %23, %26 : vector<8x128xf32>
    %c5 = arith.constant 5 : index
    %28 = memref.load %arg1[%c5] : memref<16xf32, #tpu.memory_space<smem>>
    %29 = vector.broadcast %28 : f32 to vector<8x128xf32>
    %30 = arith.mulf %29, %5 : vector<8x128xf32>
    %31 = arith.addf %27, %30 : vector<8x128xf32>
    %c10 = arith.constant 10 : index
    %32 = memref.load %arg1[%c10] : memref<16xf32, #tpu.memory_space<smem>>
    %33 = vector.broadcast %32 : f32 to vector<8x128xf32>
    %34 = arith.addf %31, %33 : vector<8x128xf32>
    %35 = math.tanh %34 : vector<8x128xf32>
    %c6 = arith.constant 6 : index
    %36 = memref.load %arg1[%c6] : memref<16xf32, #tpu.memory_space<smem>>
    %37 = vector.broadcast %36 : f32 to vector<8x128xf32>
    %38 = arith.mulf %37, %1 : vector<8x128xf32>
    %c7 = arith.constant 7 : index
    %39 = memref.load %arg1[%c7] : memref<16xf32, #tpu.memory_space<smem>>
    %40 = vector.broadcast %39 : f32 to vector<8x128xf32>
    %41 = arith.mulf %40, %3 : vector<8x128xf32>
    %42 = arith.addf %38, %41 : vector<8x128xf32>
    %c8 = arith.constant 8 : index
    %43 = memref.load %arg1[%c8] : memref<16xf32, #tpu.memory_space<smem>>
    %44 = vector.broadcast %43 : f32 to vector<8x128xf32>
    %45 = arith.mulf %44, %5 : vector<8x128xf32>
    %46 = arith.addf %42, %45 : vector<8x128xf32>
    %c11 = arith.constant 11 : index
    %47 = memref.load %arg1[%c11] : memref<16xf32, #tpu.memory_space<smem>>
    %48 = vector.broadcast %47 : f32 to vector<8x128xf32>
    %49 = arith.addf %46, %48 : vector<8x128xf32>
    %50 = math.tanh %49 : vector<8x128xf32>
    %c12 = arith.constant 12 : index
    %51 = memref.load %arg1[%c12] : memref<16xf32, #tpu.memory_space<smem>>
    %52 = vector.broadcast %51 : f32 to vector<8x128xf32>
    %53 = arith.mulf %52, %20 : vector<8x128xf32>
    %c13 = arith.constant 13 : index
    %54 = memref.load %arg1[%c13] : memref<16xf32, #tpu.memory_space<smem>>
    %55 = vector.broadcast %54 : f32 to vector<8x128xf32>
    %56 = arith.mulf %55, %35 : vector<8x128xf32>
    %57 = arith.addf %53, %56 : vector<8x128xf32>
    %c14 = arith.constant 14 : index
    %58 = memref.load %arg1[%c14] : memref<16xf32, #tpu.memory_space<smem>>
    %59 = vector.broadcast %58 : f32 to vector<8x128xf32>
    %60 = arith.mulf %59, %50 : vector<8x128xf32>
    %61 = arith.addf %57, %60 : vector<8x128xf32>
    %c15 = arith.constant 15 : index
    %62 = memref.load %arg1[%c15] : memref<16xf32, #tpu.memory_space<smem>>
    %63 = vector.broadcast %62 : f32 to vector<8x128xf32>
    %64 = arith.addf %61, %63 : vector<8x128xf32>
    %c0_9 = arith.constant 0 : index
    %c0_10 = arith.constant 0 : index
    %65 = vector.load %arg3[%c0_9, %c0_10] : memref<8x128xf32, #tpu.memory_space<vmem>>, vector<8x128xf32>
    tpu.vector_store %arg3[%c0_9, %c0_10], %64 {strides = array<i32>} : memref<8x128xf32, #tpu.memory_space<vmem>>, vector<8x128xf32>,
    return
  }
  func.func @transform_0(%arg0: i32) -> i32 {
    %c0_i32 = arith.constant 0 : i32
    %c0_i32_0 = arith.constant 0 : i32
    return %c0_i32 : i32
  }
  func.func @transform_1(%arg0: i32) -> (i32, i32, i32) {
    %c0_i32 = arith.constant 0 : i32
    %c0_i32_0 = arith.constant 0 : i32
    %c0_i32_1 = arith.constant 0 : i32
    return %c0_i32, %arg0, %c0_i32_0 : i32, i32, i32
  }
  func.func @transform_2(%arg0: i32) -> (i32, i32) {
    %c0_i32 = arith.constant 0 : i32
    %c0_i32_0 = arith.constant 0 : i32
    return %arg0, %c0_i32 : i32, i32
  }
}

</mosaic_0001>

<llo_original>
// kernel: tpu_custom_call.1
$region0: #{tpu_custom_call.1}
  #allocation0 [shape = 'u32[]', space=smem, size = 0x4, offset = 0x4, fixed_abs, tag = 'smem constant byte address 0x4 - core index']
  #allocation1 [shape = 'u32[144,128]{1,0:T(1,128)}', space=vmem, size = 0x12000, scoped, tag = 'internal scratch']
  %s0 = inlined_call_operand.hbm [shape: f32[16], index: 0, kind: input, shape index: {}]
  %s1 = inlined_call_operand.hbm [shape: f32[3,16,128], index: 1, kind: input, shape index: {}]
  %s2 = inlined_call_operand.hbm [shape: f32[16,128], index: 2, kind: output, shape index: {}]
  %s3 = sld [smem:[#allocation0]]
  $region49: #{tpu_custom_call.1} parent=0
    _
  %s5 = ssub.s32 1, %s3
  %s6 = scalar_select 0, %s5, %s3
  $region1: #{tpu_custom_call.1} parent=0
    #allocation2 [shape = 'u8[512]{0}', space=smem, size = 0x200, scoped, tag = 'input window, operand 0, single buffered']
    #allocation3 [shape = 's32[2]{0}', space=sflag, size = 0x8, scoped, tag = 'scoped memory for tpu_custom_call.1']
    #allocation4 [shape = 's32[2]{0}', space=sflag, size = 0x8, scoped, tag = 'scoped memory for tpu_custom_call.1']
    #allocation5 [shape = 's32[2]{0}', space=sflag, size = 0x8, scoped, tag = 'scoped memory for tpu_custom_call.1']
    #allocation6 [shape = 'u8[24576]{0}', space=vmem, size = 0x6000, scoped, tag = 'input window, operand 1']
    #allocation7 [shape = 'u8[8192]{0}', space=vmem, size = 0x2000, scoped, tag = 'output window, operand 0']
    %7 = vsyncpa [#allocation5], 0
    %8 = vsyncpa [#allocation3], 0
    %s9 = scalar_lea.sflag [#allocation3], 1
    %10 = vsyncpa %s9, 0
    %11 = vsyncpa [#allocation4], 0
    %s12 = scalar_lea.sflag [#allocation4], 1
    %13 = vsyncpa %s12, 0
    loop: start=0, step=1, limit=4
    $region2: #{tpu_custom_call.1} parent=1 // loop_pre_header
      _
    $region3: #{tpu_custom_call.1} parent=1 // loop_header
      %s15 = sphi 0, %s19
      %p16 = scmp.ge.s32.totalorder %s15, 4
      %s23 = sphi 0, %s23
      %s25 = sphi 0, %s23
      %s26 = sphi 0, %s25
      %s40 = sphi 0, %s26
      %s46 = sphi 0, %s48
      %s49 = sphi 0, %s46
      %s50 = sphi 0, %s49
      %s66 = sphi 0, %s50
      %s72 = sphi 0, %s74
      %s75 = sphi 0, %s72
      %s76 = sphi 0, %s75
      %s92 = sphi 0, %s76
    $region4: #{tpu_custom_call.1} parent=1 // loop_header_branch
      %18 = sbr.rel (%p16) target = $region8
    $region5: #{tpu_custom_call.1} parent=1 // loop_body
      %s20 = ssub.s32 %s15, 1
      %s21 = ssub.s32 %s15, 2
      %s22 = sadd.s32 %s15, 1
      %s24 = sadd.s32 %s23, 1
      %p27 = scmp.eq.s32.totalorder %s15, 1
      %p28 = scmp.ne.s32.totalorder %s23, %s25
      %p29 = scmp.eq.s32.totalorder %s15, 0
      %p30 = por %p28, %p29
      %p31 = scmp.ne.s32.totalorder %s23, %s25
      %p32 = scmp.eq.s32.totalorder %s20, 1
      %p33 = por %p31, %p32
      %p34 = scmp.ne.s32.totalorder %s25, %s26
      %p35 = scmp.eq.s32.totalorder %s20, 0
      %p36 = por %p34, %p35
      %p37 = scmp.ne.s32.totalorder %s25, %s26
      %p38 = scmp.eq.s32.totalorder %s21, 1
      %p39 = por %p37, %p38
      %p41 = scmp.ne.s32.totalorder %s26, %s40
      %p42 = scmp.eq.s32.totalorder %s21, 0
      %p43 = por %p41, %p42
      %s44 = ssub.s32 %s15, %s22
      %p45 = scmp.eq.s32.totalorder %s44, 0
      %s47 = sadd.s32 %s46, 1
      %s48 = scalar_select %p45, %s46, %s47
      %p51 = pneg %p45
      %p52 = scmp.eq.s32.totalorder %s15, 1
      %p53 = por %p51, %p52
      %p54 = scmp.ne.s32.totalorder %s46, %s49
      %p55 = scmp.eq.s32.totalorder %s15, 0
      %p56 = por %p54, %p55
      %p57 = scmp.ne.s32.totalorder %s46, %s49
      %p58 = scmp.eq.s32.totalorder %s20, 1
      %p59 = por %p57, %p58
      %p60 = scmp.ne.s32.totalorder %s49, %s50
      %p61 = scmp.eq.s32.totalorder %s20, 0
      %p62 = por %p60, %p61
      %p63 = scmp.ne.s32.totalorder %s49, %s50
      %p64 = scmp.eq.s32.totalorder %s21, 1
      %p65 = por %p63, %p64
      %p67 = scmp.ne.s32.totalorder %s50, %s66
      %p68 = scmp.eq.s32.totalorder %s21, 0
      %p69 = por %p67, %p68
      %s70 = ssub.s32 %s15, %s22
      %p71 = scmp.eq.s32.totalorder %s70, 0
      %s73 = sadd.s32 %s72, 1
      %s74 = scalar_select %p71, %s72, %s73
      %p77 = pneg %p71
      %p78 = scmp.eq.s32.totalorder %s15, 1
      %p79 = por %p77, %p78
      %p80 = scmp.ne.s32.totalorder %s72, %s75
      %p81 = scmp.eq.s32.totalorder %s15, 0
      %p82 = por %p80, %p81
      %p83 = scmp.ne.s32.totalorder %s72, %s75
      %p84 = scmp.eq.s32.totalorder %s20, 1
      %p85 = por %p83, %p84
      %p86 = scmp.ne.s32.totalorder %s75, %s76
      %p87 = scmp.eq.s32.totalorder %s20, 0
      %p88 = por %p86, %p87
      %p89 = scmp.ne.s32.totalorder %s75, %s76
      %p90 = scmp.eq.s32.totalorder %s21, 1
      %p91 = por %p89, %p90
      %p93 = scmp.ne.s32.totalorder %s76, %s92
      %p94 = scmp.eq.s32.totalorder %s21, 0
      %p95 = por %p93, %p94
      %p96 = scmp.le.s32.totalorder 1, %s15
      %p97 = scmp.lt.s32.totalorder %s15, 3
      %p98 = pnand %p96, %p97
      %p99 = pneg %p98
      // Predicated region
      $region9: #{tpu_custom_call.1} parent=5 // pred_check
        _
      $region10: #{tpu_custom_call.1} parent=5 // pred_check_branch
        %101 = sbr.rel (%p98) target = $region12
      $region11: #{tpu_custom_call.1} parent=5 // pred_region
        %s102 = ssub.s32 %s15, 1
        // Predicated region
        $region13: #{tpu_custom_call.1} parent=11 // pred_check
          %p103 = pneg %p36
        $region14: #{tpu_custom_call.1} parent=11 // pred_check_branch
          %105 = sbr.rel (%p103) target = $region16
        $region15: #{tpu_custom_call.1} parent=11 // pred_region
          %s107 = ssub.s32 16, 16
          %108 = vsyncadd [#allocation5], %s107
          %111 = dma.hbm_to_smem %s0, 16, [#allocation2], [#allocation5]
        $region16: #{tpu_custom_call.1} parent=11 // pred_fallthru
          _
      $region12: #{tpu_custom_call.1} parent=5 // pred_fallthru
        _
      %p112 = scmp.lt.s32.totalorder %s15, 2
      // Predicated region
      $region17: #{tpu_custom_call.1} parent=5 // pred_check
        %p113 = pneg %p112
      $region18: #{tpu_custom_call.1} parent=5 // pred_check_branch
        %115 = sbr.rel (%p113) target = $region20
      $region19: #{tpu_custom_call.1} parent=5 // pred_region
        // Predicated region
        $region21: #{tpu_custom_call.1} parent=19 // pred_check
          %p116 = pneg %p56
        $region22: #{tpu_custom_call.1} parent=19 // pred_check_branch
          %118 = sbr.rel (%p116) target = $region24
        $region23: #{tpu_custom_call.1} parent=19 // pred_region
          %s119 = sand.u32 %s46, 1
          %s120 = scalar_lea.sflag [#allocation3], %s119
          %s121 = sand.u32 %s46, 1
          %s122 = smul.addr %s121, 24
          %s123 = scalar_lea.vmem [#allocation6], %s122
          %s125 = ssub.s32 384, 384
          %126 = vsyncadd %s120, %s125
          %s127 = smul.addr %s15, 128
          %s128 = scalar_lea.hbm %s1, %s127
          %s129 = sshll.u32 %s123, 4
          %s130 = int_to_ptr.vmem [resolvable:$true] %s129
          %135 = dma.hbm_to_vmem [thread:$0]  %s128, 384, %s130, %s120, 256, 128, 8
        $region24: #{tpu_custom_call.1} parent=19 // pred_fallthru
          _
      $region20: #{tpu_custom_call.1} parent=5 // pred_fallthru
        _
      %p136 = scmp.le.s32.totalorder 1, %s15
      %p137 = scmp.lt.s32.totalorder %s15, 3
      %p138 = pnand %p136, %p137
      %p139 = pneg %p138
      // Predicated region
      $region25: #{tpu_custom_call.1} parent=5 // pred_check
        _
      $region26: #{tpu_custom_call.1} parent=5 // pred_check_branch
        %141 = sbr.rel (%p138) target = $region28
      $region27: #{tpu_custom_call.1} parent=5 // pred_region
        %s142 = ssub.s32 %s15, 1
        // Predicated region
        $region29: #{tpu_custom_call.1} parent=27 // pred_check
          %p143 = pneg %p36
        $region30: #{tpu_custom_call.1} parent=27 // pred_check_branch
          %145 = sbr.rel (%p143) target = $region32
        $region31: #{tpu_custom_call.1} parent=27 // pred_region
          %146 = dma.done [#allocation5], 16
        $region32: #{tpu_custom_call.1} parent=27 // pred_fallthru
          _
        %s147 = sand.u32 %s49, 1
        %s148 = scalar_lea.sflag [#allocation3], %s147
        %s149 = sand.u32 %s49, 1
        %s150 = smul.addr %s149, 24
        %s151 = scalar_lea.vmem [#allocation6], %s150
        // Predicated region
        $region33: #{tpu_custom_call.1} parent=27 // pred_check
          %p152 = pneg %p62
        $region34: #{tpu_custom_call.1} parent=27 // pred_check_branch
          %154 = sbr.rel (%p152) target = $region36
        $region35: #{tpu_custom_call.1} parent=27 // pred_region
          %155 = dma.done %s148, 384
        $region36: #{tpu_custom_call.1} parent=27 // pred_fallthru
          _
        %156 = sfence
        %p157 = pneg %p36
        %p158 = pneg %p33
        %s159 = sand.u32 %s49, 1
        %s160 = scalar_lea.sflag [#allocation3], %s159
        %s161 = sand.u32 %s49, 1
        %s162 = smul.addr %s161, 24
        %s163 = scalar_lea.vmem [#allocation6], %s162
        %p164 = pneg %p62
        %p165 = pneg %p59
        %p166 = pneg %p88
        %p167 = pneg %p85
        %s168 = sand.u32 %s75, 1
        %s169 = scalar_lea.sflag [#allocation4], %s168
        %s170 = sand.u32 %s75, 1
        %s171 = smul.addr %s170, 8
        %s172 = scalar_lea.vmem [#allocation7], %s171
        %v173 = vld [vmem:[%s151] sm:$0xff]
        %s174 = scalar_lea.vmem %s151, 8 [#allocation6]
        %v175 = vld [vmem:[%s174] sm:$0xff]
        %s176 = scalar_lea.vmem %s151, 16 [#allocation6]
        %v177 = vld [vmem:[%s176] sm:$0xff]
        %s178 = sld [smem:[#allocation2]]
        %v179 = vstv %s178
        %v180 = vmul.f32 %v179, %v173
        %s181 = sld [smem:[#allocation2 + $0x1]]
        %v182 = vstv %s181
        %v183 = vmul.f32 %v182, %v175
        %v184 = vadd.f32 %v180, %v183
        %s185 = sld [smem:[#allocation2 + $0x2]]
        %v186 = vstv %s185
        %v187 = vmul.f32 %v186, %v177
        %v188 = vadd.f32 %v184, %v187
        %s189 = sld [smem:[#allocation2 + $0x9]]
        %v190 = vstv %s189
        %v191 = vadd.f32 %v188, %v190
        %v192 = vtanh.pop %v191
        %s193 = sld [smem:[#allocation2 + $0x3]]
        %v194 = vstv %s193
        %v195 = vmul.f32 %v194, %v173
        %s196 = sld [smem:[#allocation2 + $0x4]]
        %v197 = vstv %s196
        %v198 = vmul.f32 %v197, %v175
        %v199 = vadd.f32 %v195, %v198
        %s200 = sld [smem:[#allocation2 + $0x5]]
        %v201 = vstv %s200
        %v202 = vmul.f32 %v201, %v177
        %v203 = vadd.f32 %v199, %v202
        %s204 = sld [smem:[#allocation2 + $0xa]]
        %v205 = vstv %s204
        %v206 = vadd.f32 %v203, %v205
        %v207 = vtanh.pop %v206
        %s208 = sld [smem:[#allocation2 + $0x6]]
        %v209 = vstv %s208
        %v210 = vmul.f32 %v209, %v173
        %s211 = sld [smem:[#allocation2 + $0x7]]
        %v212 = vstv %s211
        %v213 = vmul.f32 %v212, %v175
        %v214 = vadd.f32 %v210, %v213
        %s215 = sld [smem:[#allocation2 + $0x8]]
        %v216 = vstv %s215
        %v217 = vmul.f32 %v216, %v177
        %v218 = vadd.f32 %v214, %v217
        %s219 = sld [smem:[#allocation2 + $0xb]]
        %v220 = vstv %s219
        %v221 = vadd.f32 %v218, %v220
        %v222 = vtanh.pop %v221
        %s223 = sld [smem:[#allocation2 + $0xc]]
        %v224 = vstv %s223
        %v225 = vmul.f32 %v224, %v192
        %s226 = sld [smem:[#allocation2 + $0xd]]
        %v227 = vstv %s226
        %v228 = vmul.f32 %v227, %v207
        %v229 = vadd.f32 %v225, %v228
        %s230 = sld [smem:[#allocation2 + $0xe]]
        %v231 = vstv %s230
        %v232 = vmul.f32 %v231, %v222
        %v233 = vadd.f32 %v229, %v232
        %s234 = sld [smem:[#allocation2 + $0xf]]
        %v235 = vstv %s234
        %v236 = vadd.f32 %v233, %v235
        %237 = vst [vmem:[%s172] sm:$0xff] %v236
        %s238 = sand.u32 %s75, 1
        %s239 = scalar_lea.sflag [#allocation4], %s238
        %s240 = sand.u32 %s75, 1
        %s241 = smul.addr %s240, 8
        %s242 = scalar_lea.vmem [#allocation7], %s241
        // Predicated region
        $region37: #{tpu_custom_call.1} parent=27 // pred_check
          %p243 = pneg %p85
        $region38: #{tpu_custom_call.1} parent=27 // pred_check_branch
          %245 = sbr.rel (%p243) target = $region40
        $region39: #{tpu_custom_call.1} parent=27 // pred_region
          %s247 = ssub.s32 128, 128
          %248 = vsyncadd %s239, %s247
          %s249 = smul.addr %s20, 128
          %s250 = scalar_lea.hbm %s2, %s249
          %s252 = sshll.u32 %s242, 4
          %s253 = int_to_ptr.vmem [resolvable:$true] %s252
          %255 = dma.vmem_to_hbm [thread:$0]  %s253, 128, %s250, %s239
        $region40: #{tpu_custom_call.1} parent=27 // pred_fallthru
          _
      $region28: #{tpu_custom_call.1} parent=5 // pred_fallthru
        _
      %p256 = scmp.le.s32.totalorder 2, %s15
      // Predicated region
      $region41: #{tpu_custom_call.1} parent=5 // pred_check
        %p257 = pneg %p256
      $region42: #{tpu_custom_call.1} parent=5 // pred_check_branch
        %259 = sbr.rel (%p257) target = $region44
      $region43: #{tpu_custom_call.1} parent=5 // pred_region
        %s260 = ssub.s32 %s15, 2
        // Predicated region
        $region45: #{tpu_custom_call.1} parent=43 // pred_check
          %p261 = pneg %p91
        $region46: #{tpu_custom_call.1} parent=43 // pred_check_branch
          %263 = sbr.rel (%p261) target = $region48
        $region47: #{tpu_custom_call.1} parent=43 // pred_region
          %s264 = sand.u32 %s76, 1
          %s265 = scalar_lea.sflag [#allocation4], %s264
          %s266 = sand.u32 %s76, 1
          %s267 = smul.addr %s266, 8
          %s268 = scalar_lea.vmem [#allocation7], %s267
          %269 = dma.done %s265, 128
        $region48: #{tpu_custom_call.1} parent=43 // pred_fallthru
          _
      $region44: #{tpu_custom_call.1} parent=5 // pred_fallthru
        _
    $region6: #{tpu_custom_call.1} parent=1 // loop_footer
      %s19 = sadd.s32 1, %s15
    $region7: #{tpu_custom_call.1} parent=1 // loop_footer_branch
      %14 = sbr.rel target = $region3
    $region8: #{tpu_custom_call.1} parent=1 // loop_exit
      _
    %270 = vsyncpa [#allocation3], 1
    %s271 = scalar_lea.sflag [#allocation3], 1
    %272 = vsyncpa %s271, 1
    %273 = vsyncpa [#allocation4], 1
    %s274 = scalar_lea.sflag [#allocation4], 1
    %275 = vsyncpa %s274, 1
    %276 = vsyncpa [#allocation5], 1
    %s277 = scalar_lea.sflag [#allocation5], 1
    %278 = vsyncpa %s277, 1

</llo_original>
